<compile_context>
chip_gen: v5e
topology: v5e:2x2
jax: 0.10.0
libtpu: 0.0.40
codegen_flags: <defaults>
</compile_context>

<pallas_src>
import jax
import jax.numpy as jnp
from jax.experimental import pallas as pl
from jax.experimental.pallas import tpu as pltpu


def se_block_kernel(x_ref, w1t_ref, b1_ref, w2t_ref, b2_ref, o_ref):
    # --- Squeeze: per-batch mean over length (f32 accumulation); batch on sublanes.
    x = x_ref[...]                                                   # (Nb, C, L)
    xm = jnp.mean(x.astype(jnp.float32), axis=2)                     # (Nb, C)

    # --- Excite: the two 1x1 convs as tiny batched matmuls.  Weights arrive
    # pre-transposed and biases as row vectors, so there are no in-kernel
    # transposes and the bias adds are plain sublane broadcasts.
    h = jnp.dot(xm, w1t_ref[...],
                preferred_element_type=jnp.float32) + b1_ref[...]    # (Nb, H)
    h = jnp.maximum(h, 0.0)
    s = jnp.dot(h, w2t_ref[...],
                preferred_element_type=jnp.float32) + b2_ref[...]    # (Nb, C)
    gate = jax.nn.sigmoid(s).astype(o_ref.dtype)                     # (Nb, C)

    # --- Residual add: single block-wide add + lane-dense store; gate broadcasts
    # over L.  Done in x.dtype (bf16 fast path on v6e/v7x, exact for f32).
    o_ref[...] = x + gate[:, :, None]


def _pick_block_batches(n, per_batch_bytes, target_bytes=4 << 20):
    """Batches per block: sized by bytes (~4 MiB -> ~85%+ of HBM roofline) while
    keeping >= 4 grid steps when N allows (>= 2 pipelined steps per TensorCore on
    dual-TC parts), >= 2 steps when N >= 2."""
    cap = max(1, target_bytes // max(per_batch_bytes, 1))
    if n >= 4:
        grid_target = 4
    elif n >= 2:
        grid_target = 2
    else:
        grid_target = 1
    return int(max(1, min(cap, n // grid_target)))


def se_block(x, w1, b1, w2, b2):
    """x: (N, C, L).  Conv1d kernel_size=1 params in PyTorch shapes:
       w1: (H, C) = conv1.weight[:, :, 0], b1: (H,),
       w2: (C, H) = conv2.weight[:, :, 0], b2: (C,)."""
    N, C, L = x.shape
    H = w1.shape[0]
    itemsize = jnp.dtype(x.dtype).itemsize
    nb = _pick_block_batches(N, C * L * itemsize)
    grid = (pl.cdiv(N, nb),)   # partial last block OK: batches are independent

    # Lay out excite params so the kernel never transposes:
    # (Nb,C) @ (C,H) + (1,H) -> relu -> (Nb,H) @ (H,C) + (1,C) -> sigmoid.
    w1t = jnp.asarray(w1, jnp.float32).T            # (C, H)
    w2t = jnp.asarray(w2, jnp.float32).T            # (H, C)
    b1r = jnp.asarray(b1, jnp.float32).reshape(1, H)
    b2r = jnp.asarray(b2, jnp.float32).reshape(1, C)

    param_bytes = (w1t.size + b1r.size + w2t.size + b2r.size) * 4
    cost = pl.CostEstimate(
        flops=2 * N * C * L + 2 * N * (H * C + C * H),   # mean + residual + tiny matmuls
        transcendentals=N * C,                           # sigmoid
        bytes_accessed=2 * N * C * L * itemsize + param_bytes,
    )

    return pl.pallas_call(
        se_block_kernel,
        out_shape=jax.ShapeDtypeStruct((N, C, L), x.dtype),
        grid_spec=pltpu.PrefetchScalarGridSpec(
            num_scalar_prefetch=0,
            grid=grid,
            in_specs=[
                pl.BlockSpec((nb, C, L), lambda n: (n, 0, 0)),   # x: Nb batches per step
                pl.BlockSpec((C, H), lambda n: (0, 0)),          # conv1 weight, pre-transposed
                pl.BlockSpec((1, H), lambda n: (0, 0)),          # conv1 bias (row vector)
                pl.BlockSpec((H, C), lambda n: (0, 0)),          # conv2 weight, pre-transposed
                pl.BlockSpec((1, C), lambda n: (0, 0)),          # conv2 bias (row vector)
            ],
            out_specs=pl.BlockSpec((nb, C, L), lambda n: (n, 0, 0)),
        ),
        compiler_params=pltpu.CompilerParams(
            dimension_semantics=("parallel",),
            vmem_limit_bytes=32 * 1024 * 1024,
        ),
        cost_estimate=cost,
    )(x, w1t, b1r, w2t, b2r)


def se_block_ref(x, w1, b1, w2, b2):
    """Pure-JAX reference matching the PyTorch forward (additive gate)."""
    xm = jnp.mean(x.astype(jnp.float32), axis=2, keepdims=True)      # (N, C, 1)
    h = jnp.einsum("hc,ncl->nhl", w1, xm) + b1[None, :, None]        # (N, H, 1)
    h = jnp.maximum(h, 0.0)
    s = jnp.einsum("ch,nhl->ncl", w2, h) + b2[None, :, None]         # (N, C, 1)
    s = jax.nn.sigmoid(s)
    return (x.astype(jnp.float32) + s).astype(x.dtype)


if __name__ == "__main__":
    # SE_block(in_layer=16, out_layer=32) -> hidden H = out_layer // 8 = 4
    out_layer = 32
    H = out_layer // 8
    C, L = 16, 128

    key = jax.random.PRNGKey(0)
    kx, kw1, kb1, kw2, kb2, kx2 = jax.random.split(key, 6)

    # Conv1d kernel_size=1 weights squeezed to 2-D, biases as vectors.
    w1 = jax.random.normal(kw1, (H, C), jnp.float32) * 0.1   # conv1.weight[:, :, 0]
    b1 = jax.random.normal(kb1, (H,), jnp.float32) * 0.1     # conv1.bias
    w2 = jax.random.normal(kw2, (C, H), jnp.float32) * 0.1   # conv2.weight[:, :, 0]
    b2 = jax.random.normal(kb2, (C,), jnp.float32) * 0.1     # conv2.bias

    # Case 1: nominal small shape.
    x = jax.random.normal(kx, (2, C, L), dtype=jnp.float32)
    out = jax.block_until_ready(se_block(x, w1, b1, w2, b2))
    ref = se_block_ref(x, w1, b1, w2, b2)
    assert out.shape == x.shape
    assert jnp.allclose(out, ref, atol=1e-5, rtol=1e-5), "mismatch vs reference (N=2)"

    # Case 2: batch count that does not divide the block size (partial last block).
    x2 = jax.random.normal(kx2, (11, C, L), dtype=jnp.float32)
    out2 = jax.block_until_ready(se_block(x2, w1, b1, w2, b2))
    ref2 = se_block_ref(x2, w1, b1, w2, b2)
    assert jnp.allclose(out2, ref2, atol=1e-5, rtol=1e-5), "mismatch vs reference (N=11)"

    print("KERNEL_OK")
</pallas_src>

<mosaic_0001>
module attributes {stable_mosaic.version = 11 : i64} {
  func.func @se_block_kernel(%arg0: i32, %arg1: memref<1x16x128xf32, #tpu.memory_space<vmem>>, %arg2: memref<16x4xf32, #tpu.memory_space<vmem>>, %arg3: memref<1x4xf32, #tpu.memory_space<vmem>>, %arg4: memref<4x16xf32, #tpu.memory_space<vmem>>, %arg5: memref<1x16xf32, #tpu.memory_space<vmem>>, %arg6: memref<1x16x128xf32, #tpu.memory_space<vmem>>) attributes {dimension_semantics = [#tpu.dimension_semantics<parallel>], iteration_bounds = array<i64: 2>, scalar_prefetch = 0 : i64, scratch_operands = 0 : i64, tpu.core_type = #tpu.core_type<tc>, window_params = [{transform_indices = @transform_0, window_bounds = array<i64: 1, 16, 128>}, {pipeline_mode = #tpu.pipeline_mode<synchronous>, transform_indices = @transform_1, window_bounds = array<i64: 16, 4>}, {pipeline_mode = #tpu.pipeline_mode<synchronous>, transform_indices = @transform_2, window_bounds = array<i64: 1, 4>}, {pipeline_mode = #tpu.pipeline_mode<synchronous>, transform_indices = @transform_3, window_bounds = array<i64: 4, 16>}, {pipeline_mode = #tpu.pipeline_mode<synchronous>, transform_indices = @transform_4, window_bounds = array<i64: 1, 16>}, {transform_indices = @transform_5, window_bounds = array<i64: 1, 16, 128>}]} {
    %c0 = arith.constant 0 : index
    %c0_0 = arith.constant 0 : index
    %c0_1 = arith.constant 0 : index
    %0 = vector.load %arg1[%c0, %c0_0, %c0_1] : memref<1x16x128xf32, #tpu.memory_space<vmem>>, vector<1x16x128xf32>
    %cst = arith.constant dense<0.000000e+00> : vector<1x16xf32>
    %1 = vector.multi_reduction <add>, %0, %cst [2] : vector<1x16x128xf32> to vector<1x16xf32>
    %cst_2 = arith.constant 1.280000e+02 : f32
    %2 = vector.broadcast %cst_2 : f32 to vector<1x16xf32>
    %3 = arith.divf %1, %2 : vector<1x16xf32>
    %c0_3 = arith.constant 0 : index
    %c0_4 = arith.constant 0 : index
    %4 = vector.load %arg2[%c0_3, %c0_4] : memref<16x4xf32, #tpu.memory_space<vmem>>, vector<16x4xf32>
    %cst_5 = arith.constant dense<0.000000e+00> : vector<1x4xf32>
    %5 = tpu.matmul %3, %4, %cst_5 {dimension_numbers = #tpu.dot_dimension_numbers<[1], [0], [0], [1], [0, 0, 1, 1], [], []>} : vector<1x16xf32>, vector<16x4xf32>, vector<1x4xf32> -> vector<1x4xf32>
    %c0_6 = arith.constant 0 : index
    %c0_7 = arith.constant 0 : index
    %6 = vector.load %arg3[%c0_6, %c0_7] : memref<1x4xf32, #tpu.memory_space<vmem>>, vector<1x4xf32>
    %7 = arith.addf %5, %6 : vector<1x4xf32>
    %cst_8 = arith.constant 0.000000e+00 : f32
    %8 = vector.broadcast %cst_8 : f32 to vector<1x4xf32>
    %9 = arith.maximumf %7, %8 : vector<1x4xf32>
    %c0_9 = arith.constant 0 : index
    %c0_10 = arith.constant 0 : index
    %10 = vector.load %arg4[%c0_9, %c0_10] : memref<4x16xf32, #tpu.memory_space<vmem>>, vector<4x16xf32>
    %cst_11 = arith.constant dense<0.000000e+00> : vector<1x16xf32>
    %11 = tpu.matmul %9, %10, %cst_11 {dimension_numbers = #tpu.dot_dimension_numbers<[1], [0], [0], [1], [0, 0, 1, 1], [], []>} : vector<1x4xf32>, vector<4x16xf32>, vector<1x16xf32> -> vector<1x16xf32>
    %c0_12 = arith.constant 0 : index
    %c0_13 = arith.constant 0 : index
    %12 = vector.load %arg5[%c0_12, %c0_13] : memref<1x16xf32, #tpu.memory_space<vmem>>, vector<1x16xf32>
    %13 = arith.addf %11, %12 : vector<1x16xf32>
    %14 = arith.negf %13 : vector<1x16xf32>
    %15 = math.exp %14 : vector<1x16xf32>
    %cst_14 = arith.constant 1.000000e+00 : f32
    %16 = vector.broadcast %cst_14 : f32 to vector<1x16xf32>
    %17 = arith.addf %16, %15 : vector<1x16xf32>
    %18 = arith.divf %16, %17 : vector<1x16xf32>
    %19 = vector.shape_cast %18 : vector<1x16xf32> to vector<1x16x1xf32>
    %20 = vector.broadcast %19 : vector<1x16x1xf32> to vector<1x16x128xf32>
    %21 = arith.addf %0, %20 : vector<1x16x128xf32>
    %c0_15 = arith.constant 0 : index
    %c0_16 = arith.constant 0 : index
    %c0_17 = arith.constant 0 : index
    %22 = vector.load %arg6[%c0_15, %c0_16, %c0_17] : memref<1x16x128xf32, #tpu.memory_space<vmem>>, vector<1x16x128xf32>
    tpu.vector_store %arg6[%c0_15, %c0_16, %c0_17], %21 {strides = array<i32>} : memref<1x16x128xf32, #tpu.memory_space<vmem>>, vector<1x16x128xf32>,
    return
  }
  func.func @transform_0(%arg0: i32) -> (i32, i32, i32) {
    %c0_i32 = arith.constant 0 : i32
    %c0_i32_0 = arith.constant 0 : i32
    %c0_i32_1 = arith.constant 0 : i32
    return %arg0, %c0_i32, %c0_i32_0 : i32, i32, i32
  }
  func.func @transform_1(%arg0: i32) -> (i32, i32) {
    %c0_i32 = arith.constant 0 : i32
    %c0_i32_0 = arith.constant 0 : i32
    %c0_i32_1 = arith.constant 0 : i32
    return %c0_i32, %c0_i32_0 : i32, i32
  }
  func.func @transform_2(%arg0: i32) -> (i32, i32) {
    %c0_i32 = arith.constant 0 : i32
    %c0_i32_0 = arith.constant 0 : i32
    %c0_i32_1 = arith.constant 0 : i32
    return %c0_i32, %c0_i32_0 : i32, i32
  }
  func.func @transform_3(%arg0: i32) -> (i32, i32) {
    %c0_i32 = arith.constant 0 : i32
    %c0_i32_0 = arith.constant 0 : i32
    %c0_i32_1 = arith.constant 0 : i32
    return %c0_i32, %c0_i32_0 : i32, i32
  }
  func.func @transform_4(%arg0: i32) -> (i32, i32) {
    %c0_i32 = arith.constant 0 : i32
    %c0_i32_0 = arith.constant 0 : i32
    %c0_i32_1 = arith.constant 0 : i32
    return %c0_i32, %c0_i32_0 : i32, i32
  }
  func.func @transform_5(%arg0: i32) -> (i32, i32, i32) {
    %c0_i32 = arith.constant 0 : i32
    %c0_i32_0 = arith.constant 0 : i32
    %c0_i32_1 = arith.constant 0 : i32
    return %arg0, %c0_i32, %c0_i32_0 : i32, i32, i32
  }
}

</mosaic_0001>

<llo_original>
// kernel: tpu_custom_call.1
$region0: #{tpu_custom_call.1}
  #allocation0 [shape = 'u32[]', space=smem, size = 0x4, offset = 0x4, fixed_abs, tag = 'smem constant byte address 0x4 - core index']
  #allocation1 [shape = 'u32[72,128]{1,0:T(1,128)}', space=vmem, size = 0x9000, scoped, tag = 'internal scratch']
  %s0 = inlined_call_operand.hbm [shape: f32[2,16,128], index: 0, kind: input, shape index: {}]
  %s1 = inlined_call_operand.vmem [shape: f32[16,4], index: 1, kind: input, shape index: {}]
  %s2 = inlined_call_operand.vmem [shape: f32[1,4], index: 2, kind: input, shape index: {}]
  %s3 = inlined_call_operand.vmem [shape: f32[4,16], index: 3, kind: input, shape index: {}]
  %s4 = inlined_call_operand.vmem [shape: f32[1,16], index: 4, kind: input, shape index: {}]
  %s5 = inlined_call_operand.hbm [shape: f32[2,16,128], index: 5, kind: output, shape index: {}]
  %s6 = sld [smem:[#allocation0]]
  $region57: #{tpu_custom_call.1} parent=0
    _
  %s8 = ssub.s32 1, %s6
  %s9 = scalar_select 0, %s8, %s6
  $region1: #{tpu_custom_call.1} parent=0
    #allocation2 [shape = 'u8[16384]{0}', space=vmem, size = 0x4000, scoped, tag = 'input window, operand 0']
    #allocation3 [shape = 's32[2]{0}', space=sflag, size = 0x8, scoped, tag = 'scoped memory for tpu_custom_call.1']
    #allocation4 [shape = 's32[2]{0}', space=sflag, size = 0x8, scoped, tag = 'scoped memory for tpu_custom_call.1']
    #allocation5 [shape = 'u8[16384]{0}', space=vmem, size = 0x4000, scoped, tag = 'output window, operand 0']
    %10 = vsyncpa [#allocation3], 0
    %s11 = scalar_lea.sflag [#allocation3], 1
    %12 = vsyncpa %s11, 0
    %13 = vsyncpa [#allocation4], 0
    %s14 = scalar_lea.sflag [#allocation4], 1
    %15 = vsyncpa %s14, 0
    loop: start=0, step=1, limit=4
    $region2: #{tpu_custom_call.1} parent=1 // loop_pre_header
      _
    $region3: #{tpu_custom_call.1} parent=1 // loop_header
      %s17 = sphi 0, %s21
      %p18 = scmp.ge.s32.totalorder %s17, 4
      %s27 = sphi 0, %s29
      %s30 = sphi 0, %s27
      %s31 = sphi 0, %s30
      %s47 = sphi 0, %s31
      %s51 = sphi 0, %s51
      %s53 = sphi 0, %s51
      %s54 = sphi 0, %s53
      %s68 = sphi 0, %s54
      %s72 = sphi 0, %s72
      %s74 = sphi 0, %s72
      %s75 = sphi 0, %s74
      %s89 = sphi 0, %s75
      %s93 = sphi 0, %s93
      %s95 = sphi 0, %s93
      %s96 = sphi 0, %s95
      %s110 = sphi 0, %s96
      %s114 = sphi 0, %s114
      %s116 = sphi 0, %s114
      %s117 = sphi 0, %s116
      %s131 = sphi 0, %s117
      %s137 = sphi 0, %s139
      %s140 = sphi 0, %s137
      %s141 = sphi 0, %s140
      %s157 = sphi 0, %s141
    $region4: #{tpu_custom_call.1} parent=1 // loop_header_branch
      %20 = sbr.rel (%p18) target = $region8
    $region5: #{tpu_custom_call.1} parent=1 // loop_body
      %s22 = ssub.s32 %s17, 1
      %s23 = ssub.s32 %s17, 2
      %s24 = sadd.s32 %s17, 1
      %s25 = ssub.s32 %s17, %s24
      %p26 = scmp.eq.s32.totalorder %s25, 0
      %s28 = sadd.s32 %s27, 1
      %s29 = scalar_select %p26, %s27, %s28
      %p32 = pneg %p26
      %p33 = scmp.eq.s32.totalorder %s17, 1
      %p34 = por %p32, %p33
      %p35 = scmp.ne.s32.totalorder %s27, %s30
      %p36 = scmp.eq.s32.totalorder %s17, 0
      %p37 = por %p35, %p36
      %p38 = scmp.ne.s32.totalorder %s27, %s30
      %p39 = scmp.eq.s32.totalorder %s22, 1
      %p40 = por %p38, %p39
      %p41 = scmp.ne.s32.totalorder %s30, %s31
      %p42 = scmp.eq.s32.totalorder %s22, 0
      %p43 = por %p41, %p42
      %p44 = scmp.ne.s32.totalorder %s30, %s31
      %p45 = scmp.eq.s32.totalorder %s23, 1
      %p46 = por %p44, %p45
      %p48 = scmp.ne.s32.totalorder %s31, %s47
      %p49 = scmp.eq.s32.totalorder %s23, 0
      %p50 = por %p48, %p49
      %s52 = sadd.s32 %s51, 1
      %p55 = scmp.eq.s32.totalorder %s17, 1
      %p56 = scmp.ne.s32.totalorder %s51, %s53
      %p57 = scmp.eq.s32.totalorder %s17, 0
      %p58 = por %p56, %p57
      %p59 = scmp.ne.s32.totalorder %s51, %s53
      %p60 = scmp.eq.s32.totalorder %s22, 1
      %p61 = por %p59, %p60
      %p62 = scmp.ne.s32.totalorder %s53, %s54
      %p63 = scmp.eq.s32.totalorder %s22, 0
      %p64 = por %p62, %p63
      %p65 = scmp.ne.s32.totalorder %s53, %s54
      %p66 = scmp.eq.s32.totalorder %s23, 1
      %p67 = por %p65, %p66
      %p69 = scmp.ne.s32.totalorder %s54, %s68
      %p70 = scmp.eq.s32.totalorder %s23, 0
      %p71 = por %p69, %p70
      %s73 = sadd.s32 %s72, 1
      %p76 = scmp.eq.s32.totalorder %s17, 1
      %p77 = scmp.ne.s32.totalorder %s72, %s74
      %p78 = scmp.eq.s32.totalorder %s17, 0
      %p79 = por %p77, %p78
      %p80 = scmp.ne.s32.totalorder %s72, %s74
      %p81 = scmp.eq.s32.totalorder %s22, 1
      %p82 = por %p80, %p81
      %p83 = scmp.ne.s32.totalorder %s74, %s75
      %p84 = scmp.eq.s32.totalorder %s22, 0
      %p85 = por %p83, %p84
      %p86 = scmp.ne.s32.totalorder %s74, %s75
      %p87 = scmp.eq.s32.totalorder %s23, 1
      %p88 = por %p86, %p87
      %p90 = scmp.ne.s32.totalorder %s75, %s89
      %p91 = scmp.eq.s32.totalorder %s23, 0
      %p92 = por %p90, %p91
      %s94 = sadd.s32 %s93, 1
      %p97 = scmp.eq.s32.totalorder %s17, 1
      %p98 = scmp.ne.s32.totalorder %s93, %s95
      %p99 = scmp.eq.s32.totalorder %s17, 0
      %p100 = por %p98, %p99
      %p101 = scmp.ne.s32.totalorder %s93, %s95
      %p102 = scmp.eq.s32.totalorder %s22, 1
      %p103 = por %p101, %p102
      %p104 = scmp.ne.s32.totalorder %s95, %s96
      %p105 = scmp.eq.s32.totalorder %s22, 0
      %p106 = por %p104, %p105
      %p107 = scmp.ne.s32.totalorder %s95, %s96
      %p108 = scmp.eq.s32.totalorder %s23, 1
      %p109 = por %p107, %p108
      %p111 = scmp.ne.s32.totalorder %s96, %s110
      %p112 = scmp.eq.s32.totalorder %s23, 0
      %p113 = por %p111, %p112
      %s115 = sadd.s32 %s114, 1
      %p118 = scmp.eq.s32.totalorder %s17, 1
      %p119 = scmp.ne.s32.totalorder %s114, %s116
      %p120 = scmp.eq.s32.totalorder %s17, 0
      %p121 = por %p119, %p120
      %p122 = scmp.ne.s32.totalorder %s114, %s116
      %p123 = scmp.eq.s32.totalorder %s22, 1
      %p124 = por %p122, %p123
      %p125 = scmp.ne.s32.totalorder %s116, %s117
      %p126 = scmp.eq.s32.totalorder %s22, 0
      %p127 = por %p125, %p126
      %p128 = scmp.ne.s32.totalorder %s116, %s117
      %p129 = scmp.eq.s32.totalorder %s23, 1
      %p130 = por %p128, %p129
      %p132 = scmp.ne.s32.totalorder %s117, %s131
      %p133 = scmp.eq.s32.totalorder %s23, 0
      %p134 = por %p132, %p133
      %s135 = ssub.s32 %s17, %s24
      %p136 = scmp.eq.s32.totalorder %s135, 0
      %s138 = sadd.s32 %s137, 1
      %s139 = scalar_select %p136, %s137, %s138
      %p142 = pneg %p136
      %p143 = scmp.eq.s32.totalorder %s17, 1
      %p144 = por %p142, %p143
      %p145 = scmp.ne.s32.totalorder %s137, %s140
      %p146 = scmp.eq.s32.totalorder %s17, 0
      %p147 = por %p145, %p146
      %p148 = scmp.ne.s32.totalorder %s137, %s140
      %p149 = scmp.eq.s32.totalorder %s22, 1
      %p150 = por %p148, %p149
      %p151 = scmp.ne.s32.totalorder %s140, %s141
      %p152 = scmp.eq.s32.totalorder %s22, 0
      %p153 = por %p151, %p152
      %p154 = scmp.ne.s32.totalorder %s140, %s141
      %p155 = scmp.eq.s32.totalorder %s23, 1
      %p156 = por %p154, %p155
      %p158 = scmp.ne.s32.totalorder %s141, %s157
      %p159 = scmp.eq.s32.totalorder %s23, 0
      %p160 = por %p158, %p159
      %p161 = scmp.le.s32.totalorder 1, %s17
      %p162 = scmp.lt.s32.totalorder %s17, 3
      %p163 = pnand %p161, %p162
      %p164 = pneg %p163
      // Predicated region
      $region9: #{tpu_custom_call.1} parent=5 // pred_check
        _
      $region10: #{tpu_custom_call.1} parent=5 // pred_check_branch
        %166 = sbr.rel (%p163) target = $region12
      $region11: #{tpu_custom_call.1} parent=5 // pred_region
        %s167 = ssub.s32 %s17, 1
        // Predicated region
        $region13: #{tpu_custom_call.1} parent=11 // pred_check
          %p168 = pneg %p64
        $region14: #{tpu_custom_call.1} parent=11 // pred_check_branch
          %170 = sbr.rel (%p168) target = $region16
        $region15: #{tpu_custom_call.1} parent=11 // pred_region
          _
        $region16: #{tpu_custom_call.1} parent=11 // pred_fallthru
          _
        // Predicated region
        $region17: #{tpu_custom_call.1} parent=11 // pred_check
          %p171 = pneg %p85
        $region18: #{tpu_custom_call.1} parent=11 // pred_check_branch
          %173 = sbr.rel (%p171) target = $region20
        $region19: #{tpu_custom_call.1} parent=11 // pred_region
          _
        $region20: #{tpu_custom_call.1} parent=11 // pred_fallthru
          _
        // Predicated region
        $region21: #{tpu_custom_call.1} parent=11 // pred_check
          %p174 = pneg %p106
        $region22: #{tpu_custom_call.1} parent=11 // pred_check_branch
          %176 = sbr.rel (%p174) target = $region24
        $region23: #{tpu_custom_call.1} parent=11 // pred_region
          _
        $region24: #{tpu_custom_call.1} parent=11 // pred_fallthru
          _
        // Predicated region
        $region25: #{tpu_custom_call.1} parent=11 // pred_check
          %p177 = pneg %p127
        $region26: #{tpu_custom_call.1} parent=11 // pred_check_branch
          %179 = sbr.rel (%p177) target = $region28
        $region27: #{tpu_custom_call.1} parent=11 // pred_region
          _
        $region28: #{tpu_custom_call.1} parent=11 // pred_fallthru
          _
      $region12: #{tpu_custom_call.1} parent=5 // pred_fallthru
        _
      %p180 = scmp.lt.s32.totalorder %s17, 2
      // Predicated region
      $region29: #{tpu_custom_call.1} parent=5 // pred_check
        %p181 = pneg %p180
      $region30: #{tpu_custom_call.1} parent=5 // pred_check_branch
        %183 = sbr.rel (%p181) target = $region32
      $region31: #{tpu_custom_call.1} parent=5 // pred_region
        // Predicated region
        $region33: #{tpu_custom_call.1} parent=31 // pred_check
          %p184 = pneg %p37
        $region34: #{tpu_custom_call.1} parent=31 // pred_check_branch
          %186 = sbr.rel (%p184) target = $region36
        $region35: #{tpu_custom_call.1} parent=31 // pred_region
          %s187 = sand.u32 %s27, 1
          %s188 = scalar_lea.sflag [#allocation3], %s187
          %s189 = sand.u32 %s27, 1
          %s190 = smul.addr %s189, 16
          %s191 = scalar_lea.vmem [#allocation2], %s190
          %193 = vsyncadd %s188, 0
          %s194 = smul.addr %s17, 2
          %s195 = smul.addr %s194, 8
          %s196 = scalar_lea.hbm %s0, %s195
          %s197 = sshll.u32 %s196, 4
          %s198 = int_to_ptr.hbm [resolvable:$true] %s197
          %s199 = sshll.u32 %s191, 4
          %s200 = int_to_ptr.vmem [resolvable:$true] %s199
          %205 = dma.hbm_to_vmem [thread:$0]  %s198, 256, %s200, %s188, 128, 128, 8
        $region36: #{tpu_custom_call.1} parent=31 // pred_fallthru
          _
      $region32: #{tpu_custom_call.1} parent=5 // pred_fallthru
        _
      %p206 = scmp.le.s32.totalorder 1, %s17
      %p207 = scmp.lt.s32.totalorder %s17, 3
      %p208 = pnand %p206, %p207
      %p209 = pneg %p208
      // Predicated region
      $region37: #{tpu_custom_call.1} parent=5 // pred_check
        _
      $region38: #{tpu_custom_call.1} parent=5 // pred_check_branch
        %211 = sbr.rel (%p208) target = $region40
      $region39: #{tpu_custom_call.1} parent=5 // pred_region
        %s212 = ssub.s32 %s17, 1
        %s213 = sand.u32 %s30, 1
        %s214 = scalar_lea.sflag [#allocation3], %s213
        %s215 = sand.u32 %s30, 1
        %s216 = smul.addr %s215, 16
        %s217 = scalar_lea.vmem [#allocation2], %s216
        // Predicated region
        $region41: #{tpu_custom_call.1} parent=39 // pred_check
          %p218 = pneg %p43
        $region42: #{tpu_custom_call.1} parent=39 // pred_check_branch
          %220 = sbr.rel (%p218) target = $region44
        $region43: #{tpu_custom_call.1} parent=39 // pred_region
          %222 = dma.done %s214, 256
        $region44: #{tpu_custom_call.1} parent=39 // pred_fallthru
          _
        %s223 = sand.u32 %s30, 1
        %s224 = scalar_lea.sflag [#allocation3], %s223
        %s225 = sand.u32 %s30, 1
        %s226 = smul.addr %s225, 16
        %s227 = scalar_lea.vmem [#allocation2], %s226
        %p228 = pneg %p43
        %p229 = pneg %p40
        %p230 = pneg %p64
        %p231 = pneg %p61
        %p232 = pneg %p85
        %p233 = pneg %p82
        %p234 = pneg %p106
        %p235 = pneg %p103
        %p236 = pneg %p127
        %p237 = pneg %p124
        %p238 = pneg %p153
        %p239 = pneg %p150
        %s240 = sand.u32 %s140, 1
        %s241 = scalar_lea.sflag [#allocation4], %s240
        %s242 = sand.u32 %s140, 1
        %s243 = smul.addr %s242, 16
        %s244 = scalar_lea.vmem [#allocation5], %s243
        %v245 = vld [vmem:[%s217] sm:$0xff]
        %v246 = vld [vmem:[%s217 + $0x8] sm:$0xff]
        %247 = vadd.xlane.f32.xlu0 %v245
        %v248 = vpop.xlane.xlu0 %247
        %249 = vadd.xlane.f32.xlu0 %v246
        %v250 = vpop.xlane.xlu0 %249
        %v251 = vrcp.pop 128.0
        %v252 = vmul.f32 128.0, %v251
        %v253 = vsub.f32 1.0, %v252
        %v254 = vmul.f32 %v251, %v253
        %v255 = vadd.f32 %v251, %v254
        %vm256 = vweird.f32 %v251
        %v257 = vsel %vm256, %v251, %v255
        %v258 = vmul.f32 %v248, %v257
        %v259 = vmul.f32 %v250, %v257
        %v260 = vld [vmem:[%s1] sm:$0xff]
        %v261 = vld [vmem:[%s1 + $0x8] sm:$0xff]
        %v262 = vld [vmem:[%s2] sm:$0x1]
        %v265 = vlaneseq
        %v266 = vand.u32 %v265, 127
        %v267 = vperm.slane %v258, %v266
        %v268 = vadd.s32 %v266, 4294967288
        %v269 = vperm.slane %v259, %v268
        %vm270 = vcmask 130112
        %v271 = vsel %vm270, %v269, %v267
        %vm272 = vcmask 130048
        %v273 = vsel %vm272, %v271, 0
        %275 = vmatpush.msra.mxu0 0.0
        %276 = vmatpush.msra.mxu0 0.0
        %277 = vmatpush.msra.mxu0 0.0
        %278 = vmatpush.msra.mxu0 0.0
        %279 = vmatpush.msra.mxu0 0.0
        %280 = vmatpush.msra.mxu0 0.0
        %281 = vmatpush.msra.mxu0 0.0
        %282 = vmatpush.msra.mxu0 0.0
        %283 = vmatpush.msra.mxu0 0.0
        %284 = vmatpush.msra.mxu0 0.0
        %285 = vmatpush.msra.mxu0 0.0
        %286 = vmatpush.msra.mxu0 0.0
        %287 = vmatpush.msra.mxu0 0.0
        %288 = vmatpush.msra.mxu0 0.0
        %289 = vmatpush.msra.mxu0 %v261
        %290 = vmatpush.msra.mxu0 %v260
        %291 = vmatmul.f32.gmra.mxu0 %v273
        %v292 = vpop.f32.mrf.mxu0
        %v293 = vadd.f32 %v262, %v292
        %294 = vdwg.mxu0
        %v295 = vmax.f32 %v293, 0.0
        %v296 = vld [vmem:[%s3] sm:$0xf]
        %v297 = vld [vmem:[%s4] sm:$0x1]
        %vm298 = vcmask 31744
        %v300 = vsel %vm298, %v295, 0
        %vm302 = vcmask 1043456
        %v304 = vsel %vm302, %v296, 0
        %306 = vmatpush.msra.mxu0 0.0
        %307 = vmatpush.msra.mxu0 0.0
        %308 = vmatpush.msra.mxu0 0.0
        %309 = vmatpush.msra.mxu0 0.0
        %310 = vmatpush.msra.mxu0 0.0
        %311 = vmatpush.msra.mxu0 0.0
        %312 = vmatpush.msra.mxu0 0.0
        %313 = vmatpush.msra.mxu0 0.0
        %314 = vmatpush.msra.mxu0 0.0
        %315 = vmatpush.msra.mxu0 0.0
        %316 = vmatpush.msra.mxu0 0.0
        %317 = vmatpush.msra.mxu0 0.0
        %318 = vmatpush.msra.mxu0 0.0
        %319 = vmatpush.msra.mxu0 0.0
        %320 = vmatpush.msra.mxu0 0.0
        %321 = vmatpush.msra.mxu0 %v304
        %322 = vmatmul.f32.gmra.mxu0 %v300
        %v323 = vpop.f32.mrf.mxu0
        %v324 = vadd.f32 %v297, %v323
        %325 = vdwg.mxu0
        %v326 = vxor.u32 %v324, 2147483648
        %v327 = vmul.f32 %v326, 1.442695
        %v328 = vpow.pop %v327
        %v329 = vadd.f32 %v328, 1.0
        %v330 = vrcp.pop %v329
        %v331 = vmul.f32 %v329, %v330
        %v332 = vsub.f32 1.0, %v331
        %v333 = vmul.f32 %v330, %v332
        %v334 = vadd.f32 %v330, %v333
        %vm335 = vweird.f32 %v329
        %vm336 = vweird.f32 %v330
        %vm337 = vmor %vm335, %vm336
        %v338 = vsel %vm337, %v330, %v334
        %v339 = vand.u32 2147483647, %v329
        %vm340 = vcmp.eq.f32.partialorder %v339, 8.507059e+37
        %v341 = vand.u32 %v329, 2147483648
        %v342 = vor.u32 1.1754944e-38, %v341
        %v343 = vsel %vm340, %v342, %v338
        %v344 = vmul.f32 1.0, %v343
        %v345 = vperm.slane %v344, 0
        %v346 = vlaneseq
        %v347 = vshrl.u32 %v346, 7
        %349 = vset.pattern.permute.xlu0 %v347
        %350 = vperm.xlu0 %349, %v345
        %v351 = vpop.permute.xlu0 %350
        %v352 = vlaneseq
        %v353 = vshrl.u32 %v352, 7
        %v354 = vadd.s32 %v353, 8
        %355 = vset.pattern.permute.xlu0 %v354
        %356 = vperm.xlu0 %355, %v345
        %v357 = vpop.permute.xlu0 %356
        %v358 = vadd.f32 %v245, %v351
        %v359 = vadd.f32 %v246, %v357
        %360 = vst [vmem:[%s244] sm:$0xff] %v358
        %361 = vst [vmem:[%s244 + $0x8] sm:$0xff] %v359
        %s362 = sand.u32 %s140, 1
        %s363 = scalar_lea.sflag [#allocation4], %s362
        %s364 = sand.u32 %s140, 1
        %s365 = smul.addr %s364, 16
        %s366 = scalar_lea.vmem [#allocation5], %s365
        // Predicated region
        $region45: #{tpu_custom_call.1} parent=39 // pred_check
          %p367 = pneg %p150
        $region46: #{tpu_custom_call.1} parent=39 // pred_check_branch
          %369 = sbr.rel (%p367) target = $region48
        $region47: #{tpu_custom_call.1} parent=39 // pred_region
          %371 = vsyncadd %s363, 0
          %s372 = smul.addr %s22, 2
          %s373 = smul.addr %s372, 8
          %s374 = scalar_lea.hbm %s5, %s373
          %s375 = sshll.u32 %s366, 4
          %s376 = int_to_ptr.vmem [resolvable:$true] %s375
          %s377 = sshll.u32 %s374, 4
          %s378 = int_to_ptr.hbm [resolvable:$true] %s377
          %383 = dma.vmem_to_hbm [thread:$0]  %s376, 256, %s378, %s363, 128, 128, 8
        $region48: #{tpu_custom_call.1} parent=39 // pred_fallthru
          _
      $region40: #{tpu_custom_call.1} parent=5 // pred_fallthru
        _
      %p384 = scmp.le.s32.totalorder 2, %s17
      // Predicated region
      $region49: #{tpu_custom_call.1} parent=5 // pred_check
        %p385 = pneg %p384
      $region50: #{tpu_custom_call.1} parent=5 // pred_check_branch
        %387 = sbr.rel (%p385) target = $region52
      $region51: #{tpu_custom_call.1} parent=5 // pred_region
        %s388 = ssub.s32 %s17, 2
        // Predicated region
        $region53: #{tpu_custom_call.1} parent=51 // pred_check
          %p389 = pneg %p156
        $region54: #{tpu_custom_call.1} parent=51 // pred_check_branch
          %391 = sbr.rel (%p389) target = $region56
        $region55: #{tpu_custom_call.1} parent=51 // pred_region
          %s392 = sand.u32 %s141, 1
          %s393 = scalar_lea.sflag [#allocation4], %s392
          %s394 = sand.u32 %s141, 1
          %s395 = smul.addr %s394, 16
          %s396 = scalar_lea.vmem [#allocation5], %s395
          %398 = dma.done %s393, 256
        $region56: #{tpu_custom_call.1} parent=51 // pred_fallthru
          _
      $region52: #{tpu_custom_call.1} parent=5 // pred_fallthru
        _
    $region6: #{tpu_custom_call.1} parent=1 // loop_footer
      %s21 = sadd.s32 1, %s17
    $region7: #{tpu_custom_call.1} parent=1 // loop_footer_branch
      %16 = sbr.rel target = $region3
    $region8: #{tpu_custom_call.1} parent=1 // loop_exit
      _
    %399 = vsyncpa [#allocation3], 1
    %s400 = scalar_lea.sflag [#allocation3], 1
    %401 = vsyncpa %s400, 1
    %402 = vsyncpa [#allocation4], 1
    %s403 = scalar_lea.sflag [#allocation4], 1
    %404 = vsyncpa %s403, 1

</llo_original>
